<compile_context>
chip_gen: v5e
topology: v5e:2x2
jax: 0.10.0
libtpu: 0.0.40
codegen_flags: <defaults>
</compile_context>

<pallas_src>
import functools

import numpy as np
import jax
import jax.numpy as jnp
from jax.experimental import pallas as pl
from jax.experimental.pallas import tpu as pltpu


def _round_up(x, m):
    return ((x + m - 1) // m) * m


def qfm_kernel(s_ref, sel_ref, linb_ref, out_ref, *, D):
    """One batch tile.

    s_ref   : (R, NO)  f32  precomputed selection matrix (whole, VMEM resident):
                            lanes [0,D) = masked codebook rows, lane D = squared
                            segment norm, lanes > D = zero padding.
    sel_ref : (tb, R)  i32  per-sample match targets: sel[b, r] == r  iff  row r
                            of S is selected for sample b (else -1 / mismatch).
    linb_ref: (tb, 1)  f32  FeaturesLinear(x) per sample (weights summed + bias).
    out_ref : (tb, 1)  f32
    """
    sel = sel_ref[...]                                               # (tb, R) i32
    lane_r = jax.lax.broadcasted_iota(jnp.int32, sel.shape, 1)       # (tb, R)
    onehot = (sel == lane_r).astype(jnp.float32)                     # (tb, R)

    # One MXU matmul does the codebook gather, the sum over fields, and t2.
    mm = jnp.dot(onehot, s_ref[...],
                 precision=jax.lax.Precision.HIGHEST,
                 preferred_element_type=jnp.float32)                 # (tb, NO)

    # lanes < D : s[b, d] = sum_f emb[b, f, d]
    # lane  == D: t2[b]   = sum_f sum_d emb[b, f, d]^2
    lane = jax.lax.broadcasted_iota(jnp.int32, mm.shape, 1)
    sq_mask = (lane < D).astype(jnp.float32)
    t2_mask = (lane == D).astype(jnp.float32)
    fm = jnp.sum(0.5 * (mm * mm * sq_mask - mm * t2_mask),
                 axis=-1, keepdims=True)                             # (tb, 1)
    out_ref[...] = linb_ref[...] + fm


def qfm_forward(x, cb_index, codebooks, fc_weight, bias, offsets, *, K, M,
                block_b=512):
    """QFM forward: returns (B,) float32."""
    B, F = x.shape
    FK, D = codebooks.shape
    assert FK == F * K and D % M == 0
    plen = D // M
    FMK = F * M * K
    R = _round_up(FMK, 128)            # one-hot / contraction width (lane-dense)
    NO = _round_up(D + 1, 128)         # matmul output lanes (lane-dense)

    # ---- data-dependent row lookups over the big per-feature tables (glue) ----
    idx = x + offsets[None, :]                                   # (B, F)
    codes = cb_index[idx].astype(jnp.int32)                      # (B, F, M) -- tiny
    codes_flat = codes.reshape(B, F * M)                         # column j = f*M + m
    linb = (jnp.sum(fc_weight[idx], axis=1) + bias)              # (B,)
    linb = linb.astype(jnp.float32).reshape(B, 1)

    # ---- per-sample one-hot match targets, already in lane layout -------------
    # sel[b, j*K + k] == (j*K + k)  iff  codes_flat[b, j] == k ; padded lanes -> -1
    r = np.arange(R)
    j_of_r = np.minimum(r // K, F * M - 1).astype(np.int32)
    base = ((r // K) * K).astype(np.int32)
    valid = (r < FMK)
    sel = codes_flat[:, jnp.asarray(j_of_r)] + jnp.asarray(base)[None, :]
    sel = jnp.where(jnp.asarray(valid)[None, :], sel, jnp.int32(-1))  # (B, R) i32

    # ---- static selection matrix S (tiny, VMEM resident) ----------------------
    rr = np.arange(FMK)
    f_of = rr // (M * K)
    m_of = (rr // K) % M
    k_of = rr % K
    seg_of_d = np.arange(D) // plen
    seg_mask = (seg_of_d[None, :] == m_of[:, None]).astype(np.float32)  # (FMK, D)
    cb_rows = codebooks[jnp.asarray(f_of * K + k_of)].astype(jnp.float32)
    s_main = cb_rows * jnp.asarray(seg_mask)                            # (FMK, D)
    sq_col = jnp.sum(s_main * s_main, axis=-1, keepdims=True)           # (FMK, 1)
    S = jnp.concatenate([s_main, sq_col], axis=-1)                      # (FMK, D+1)
    S = jnp.pad(S, ((0, R - FMK), (0, NO - (D + 1))))                   # (R, NO)

    # ---- batch tiling: >= 2 tiles when possible (v7x megacore), sublane-mult 8 -
    tb_cap = _round_up(max(-(-B // 2), 1), 8)
    tb = _round_up(max(min(block_b, tb_cap), 8), 8)
    num_tiles = int(pl.cdiv(B, tb))      # ragged last tile handled by Pallas masking

    kernel = functools.partial(qfm_kernel, D=D)
    out = pl.pallas_call(
        kernel,
        out_shape=jax.ShapeDtypeStruct((B, 1), jnp.float32),
        grid=(num_tiles,),
        in_specs=[
            pl.BlockSpec((R, NO), lambda i: (0, 0)),         # S matrix (whole, VMEM)
            pl.BlockSpec((tb, R), lambda i: (i, 0)),          # per-sample match targets
            pl.BlockSpec((tb, 1), lambda i: (i, 0)),          # per-sample linear+bias
        ],
        out_specs=pl.BlockSpec((tb, 1), lambda i: (i, 0)),
        compiler_params=pltpu.CompilerParams(
            dimension_semantics=("parallel",)),
    )(S, sel, linb)
    return out[:B, 0]                                                 # torch .squeeze(1)


# ----------------------------- pure-JAX reference ---------------------------
def quantized_embedding_ref(x, cb_index, codebooks, offsets, K, M):
    B, F = x.shape
    FK, D = codebooks.shape
    plen = D // M
    codes = cb_index[x + offsets[None, :]]                       # (B, F, M)
    rows = codes + (jnp.arange(F, dtype=jnp.int32) * K)[None, :, None]
    cb_seg = codebooks.reshape(FK, M, plen)                      # direct segment gather
    seg = cb_seg[rows, jnp.arange(M)[None, None, :], :]          # (B, F, M, plen)
    return seg.reshape(B, F, D)


def qfm_reference(x, cb_index, codebooks, fc_weight, bias, offsets, *, K, M):
    emb = quantized_embedding_ref(x, cb_index, codebooks, offsets, K, M)
    s1 = jnp.sum(emb, axis=1)
    s2 = jnp.sum(emb * emb, axis=1)
    fm = 0.5 * jnp.sum(s1 * s1 - s2, axis=-1)
    lin = jnp.sum(fc_weight[x + offsets[None, :]], axis=1) + bias
    return lin + fm


if __name__ == "__main__":
    # Small synthetic config consistent with the module's __init__
    field_dims = (5, 7, 6, 9)          # opt.field_dims
    F = len(field_dims)
    D = 32                             # opt.dim
    M = 4                              # opt.M  (dim % M == 0)
    K = 4                              # opt.K
    total = int(sum(field_dims))
    offsets = jnp.asarray(
        np.array((0, *np.cumsum(field_dims)[:-1]), dtype=np.int32))

    key = jax.random.PRNGKey(0)
    k_codes, k_cb, k_fc, k_bias, k_x1, k_x2 = jax.random.split(key, 6)

    cb_index = jax.random.randint(k_codes, (total, M), 0, K, dtype=jnp.int32)
    codebooks = 0.05 * jax.random.normal(k_cb, (F * K, D), dtype=jnp.float32)
    fc_weight = 0.05 * jax.random.normal(k_fc, (total,), dtype=jnp.float32)
    bias = 0.1 * jax.random.normal(k_bias, (), dtype=jnp.float32)

    def make_x(k, batch):
        ks = jax.random.split(k, F)
        return jnp.stack(
            [jax.random.randint(ks[f], (batch,), 0, field_dims[f],
                                dtype=jnp.int32) for f in range(F)], axis=1)

    # (batch, block_b): small single-tile case + multi-tile case with ragged tail
    for kx, batch, block_b in ((k_x1, 8, 256), (k_x2, 300, 128)):
        x = make_x(kx, batch)                                     # (B, F) ids
        y = qfm_forward(x, cb_index, codebooks, fc_weight, bias, offsets,
                        K=K, M=M, block_b=block_b)
        jax.block_until_ready(y)
        y_ref = qfm_reference(x, cb_index, codebooks, fc_weight, bias, offsets,
                              K=K, M=M)
        assert y.shape == (batch,)
        np.testing.assert_allclose(np.asarray(y), np.asarray(y_ref),
                                   rtol=1e-5, atol=1e-5)
    print("KERNEL_OK")
</pallas_src>

<mosaic_0001>
module attributes {stable_mosaic.version = 11 : i64} {
  func.func @qfm_kernel(%arg0: i32, %arg1: memref<128x128xf32, #tpu.memory_space<vmem>>, %arg2: memref<8x128xi32, #tpu.memory_space<vmem>>, %arg3: memref<8x1xf32, #tpu.memory_space<vmem>>, %arg4: memref<8x1xf32, #tpu.memory_space<vmem>>) attributes {dimension_semantics = [#tpu.dimension_semantics<parallel>], iteration_bounds = array<i64: 1>, scalar_prefetch = 0 : i64, scratch_operands = 0 : i64, tpu.core_type = #tpu.core_type<tc>, window_params = [{pipeline_mode = #tpu.pipeline_mode<synchronous>, transform_indices = @transform_0, window_bounds = array<i64: 128, 128>}, {transform_indices = @transform_1, window_bounds = array<i64: 8, 128>}, {transform_indices = @transform_2, window_bounds = array<i64: 8, 1>}, {transform_indices = @transform_3, window_bounds = array<i64: 8, 1>}]} {
    %c0 = arith.constant 0 : index
    %c0_0 = arith.constant 0 : index
    %0 = vector.load %arg2[%c0, %c0_0] : memref<8x128xi32, #tpu.memory_space<vmem>>, vector<8x128xi32>
    %1 = tpu.iota {dimensions = array<i32: 1>} : vector<8x128xi32>
    %2 = arith.cmpi eq, %0, %1 : vector<8x128xi32>
    %3 = arith.extui %2 : vector<8x128xi1> to vector<8x128xi32>
    %4 = arith.sitofp %3 : vector<8x128xi32> to vector<8x128xf32>
    %c0_1 = arith.constant 0 : index
    %c0_2 = arith.constant 0 : index
    %5 = vector.load %arg1[%c0_1, %c0_2] : memref<128x128xf32, #tpu.memory_space<vmem>>, vector<128x128xf32>
    %cst = arith.constant dense<0.000000e+00> : vector<8x128xf32>
    %6 = tpu.matmul %4, %5, %cst {dimension_numbers = #tpu.dot_dimension_numbers<[1], [0], [0], [1], [0, 0, 1, 1], [], []>, precision = #tpu.contract_precision<fp32>} : vector<8x128xf32>, vector<128x128xf32>, vector<8x128xf32> -> vector<8x128xf32>
    %7 = tpu.iota {dimensions = array<i32: 1>} : vector<8x128xi32>
    %c32_i32 = arith.constant 32 : i32
    %8 = vector.broadcast %c32_i32 : i32 to vector<8x128xi32>
    %9 = arith.cmpi slt, %7, %8 : vector<8x128xi32>
    %10 = arith.extui %9 : vector<8x128xi1> to vector<8x128xi32>
    %11 = arith.sitofp %10 : vector<8x128xi32> to vector<8x128xf32>
    %c32_i32_3 = arith.constant 32 : i32
    %12 = vector.broadcast %c32_i32_3 : i32 to vector<8x128xi32>
    %13 = arith.cmpi eq, %7, %12 : vector<8x128xi32>
    %14 = arith.extui %13 : vector<8x128xi1> to vector<8x128xi32>
    %15 = arith.sitofp %14 : vector<8x128xi32> to vector<8x128xf32>
    %16 = arith.mulf %6, %6 : vector<8x128xf32>
    %17 = arith.mulf %16, %11 : vector<8x128xf32>
    %18 = arith.mulf %6, %15 : vector<8x128xf32>
    %19 = arith.subf %17, %18 : vector<8x128xf32>
    %cst_4 = arith.constant 5.000000e-01 : f32
    %20 = vector.broadcast %cst_4 : f32 to vector<8x128xf32>
    %21 = arith.mulf %20, %19 : vector<8x128xf32>
    %cst_5 = arith.constant dense<0.000000e+00> : vector<8xf32>
    %22 = vector.multi_reduction <add>, %21, %cst_5 [1] : vector<8x128xf32> to vector<8xf32>
    %23 = vector.shape_cast %22 : vector<8xf32> to vector<8x1xf32>
    %c0_6 = arith.constant 0 : index
    %c0_7 = arith.constant 0 : index
    %24 = vector.load %arg3[%c0_6, %c0_7] : memref<8x1xf32, #tpu.memory_space<vmem>>, vector<8x1xf32>
    %25 = arith.addf %24, %23 : vector<8x1xf32>
    %c0_8 = arith.constant 0 : index
    %c0_9 = arith.constant 0 : index
    %26 = vector.load %arg4[%c0_8, %c0_9] : memref<8x1xf32, #tpu.memory_space<vmem>>, vector<8x1xf32>
    tpu.vector_store %arg4[%c0_8, %c0_9], %25 {strides = array<i32>} : memref<8x1xf32, #tpu.memory_space<vmem>>, vector<8x1xf32>,
    return
  }
  func.func @transform_0(%arg0: i32) -> (i32, i32) {
    %c0_i32 = arith.constant 0 : i32
    %c0_i32_0 = arith.constant 0 : i32
    %c0_i32_1 = arith.constant 0 : i32
    return %c0_i32, %c0_i32_0 : i32, i32
  }
  func.func @transform_1(%arg0: i32) -> (i32, i32) {
    %c0_i32 = arith.constant 0 : i32
    %c0_i32_0 = arith.constant 0 : i32
    return %arg0, %c0_i32 : i32, i32
  }
  func.func @transform_2(%arg0: i32) -> (i32, i32) {
    %c0_i32 = arith.constant 0 : i32
    %c0_i32_0 = arith.constant 0 : i32
    return %arg0, %c0_i32 : i32, i32
  }
  func.func @transform_3(%arg0: i32) -> (i32, i32) {
    %c0_i32 = arith.constant 0 : i32
    %c0_i32_0 = arith.constant 0 : i32
    return %arg0, %c0_i32 : i32, i32
  }
}

</mosaic_0001>

<llo_original>
// kernel: tpu_custom_call.1
$region0: #{tpu_custom_call.1}
  #allocation0 [shape = 'u32[]', space=smem, size = 0x4, offset = 0x4, fixed_abs, tag = 'smem constant byte address 0x4 - core index']
  #allocation1 [shape = 'u32[72,128]{1,0:T(1,128)}', space=vmem, size = 0x9000, scoped, tag = 'internal scratch']
  %s0 = inlined_call_operand.hbm [shape: f32[128,128], index: 0, kind: input, shape index: {}]
  %s1 = inlined_call_operand.vmem [shape: s32[8,128], index: 1, kind: input, shape index: {}]
  %s2 = inlined_call_operand.vmem [shape: f32[8,1], index: 2, kind: input, shape index: {}]
  %s3 = inlined_call_operand.vmem [shape: f32[8,1], index: 3, kind: output, shape index: {}]
  %s4 = sld [smem:[#allocation0]]
  $region26: #{tpu_custom_call.1} parent=0
    _
  %s6 = ssub.s32 1, %s4
  %s7 = scalar_select 0, %s6, %s4
  $region1: #{tpu_custom_call.1} parent=0
    #allocation2 [shape = 'u8[65536]{0}', space=vmem, size = 0x10000, scoped, tag = 'input window, operand 0, single buffered']
    #allocation3 [shape = 's32[1]{0}', space=sflag, size = 0x4, scoped, tag = 'scoped memory for tpu_custom_call.1']
    %8 = vsyncpa [#allocation3], 0
    // Predicated region
    $region2: #{tpu_custom_call.1} parent=1 // pred_check
      _
    $region3: #{tpu_custom_call.1} parent=1 // pred_check_branch
      %10 = sbr.rel (0) target = $region5
    $region4: #{tpu_custom_call.1} parent=1 // pred_region
      %12 = vsyncadd [#allocation3], 0
      %s13 = sshll.u32 %s0, 4
      %s14 = int_to_ptr.hbm [resolvable:$true] %s13
      %s15 = sshll.u32 [#allocation2], 4
      %s16 = int_to_ptr.vmem [resolvable:$true] %s15
      %21 = dma.hbm_to_vmem [thread:$0]  %s14, 2048, %s16, [#allocation3], 128, 128, 8
    $region5: #{tpu_custom_call.1} parent=1 // pred_fallthru
      _
    // Predicated region
    $region6: #{tpu_custom_call.1} parent=1 // pred_check
      _
    $region7: #{tpu_custom_call.1} parent=1 // pred_check_branch
      %23 = sbr.rel (0) target = $region9
    $region8: #{tpu_custom_call.1} parent=1 // pred_region
      _
    $region9: #{tpu_custom_call.1} parent=1 // pred_fallthru
      _
    // Predicated region
    $region10: #{tpu_custom_call.1} parent=1 // pred_check
      _
    $region11: #{tpu_custom_call.1} parent=1 // pred_check_branch
      %25 = sbr.rel (0) target = $region13
    $region12: #{tpu_custom_call.1} parent=1 // pred_region
      _
    $region13: #{tpu_custom_call.1} parent=1 // pred_fallthru
      _
    // Predicated region
    $region14: #{tpu_custom_call.1} parent=1 // pred_check
      _
    $region15: #{tpu_custom_call.1} parent=1 // pred_check_branch
      %27 = sbr.rel (0) target = $region17
    $region16: #{tpu_custom_call.1} parent=1 // pred_region
      %29 = dma.done [#allocation3], 2048
    $region17: #{tpu_custom_call.1} parent=1 // pred_fallthru
      _
    %v30 = vld [vmem:[%s1] sm:$0xff]
    %v31 = vlaneseq
    %v32 = vand.u32 %v31, 127
    %vm33 = vcmp.eq.s32.totalorder %v30, %v32
    %v34 = vsel %vm33, 1, 0
    %v35 = vcvt.s32.f32 %v34
    %v36 = vld [vmem:[#allocation2] sm:$0xff]
    %v37 = vld [vmem:[#allocation2 + $0x8] sm:$0xff]
    %v38 = vld [vmem:[#allocation2 + $0x10] sm:$0xff]
    %v39 = vld [vmem:[#allocation2 + $0x18] sm:$0xff]
    %v40 = vld [vmem:[#allocation2 + $0x20] sm:$0xff]
    %v41 = vld [vmem:[#allocation2 + $0x28] sm:$0xff]
    %v42 = vld [vmem:[#allocation2 + $0x30] sm:$0xff]
    %v43 = vld [vmem:[#allocation2 + $0x38] sm:$0xff]
    %v44 = vld [vmem:[#allocation2 + $0x40] sm:$0xff]
    %v45 = vld [vmem:[#allocation2 + $0x48] sm:$0xff]
    %v46 = vld [vmem:[#allocation2 + $0x50] sm:$0xff]
    %v47 = vld [vmem:[#allocation2 + $0x58] sm:$0xff]
    %v48 = vld [vmem:[#allocation2 + $0x60] sm:$0xff]
    %v49 = vld [vmem:[#allocation2 + $0x68] sm:$0xff]
    %v50 = vld [vmem:[#allocation2 + $0x70] sm:$0xff]
    %v51 = vld [vmem:[#allocation2 + $0x78] sm:$0xff]
    %v52 = vand.u32 %v51, 4294901760
    %53 = vmatpush.msra.mxu0 %v52
    %v54 = vand.u32 %v50, 4294901760
    %55 = vmatpush.msra.mxu0 %v54
    %v56 = vand.u32 %v49, 4294901760
    %57 = vmatpush.msra.mxu0 %v56
    %v58 = vand.u32 %v48, 4294901760
    %59 = vmatpush.msra.mxu0 %v58
    %v60 = vand.u32 %v47, 4294901760
    %61 = vmatpush.msra.mxu0 %v60
    %v62 = vand.u32 %v46, 4294901760
    %63 = vmatpush.msra.mxu0 %v62
    %v64 = vand.u32 %v45, 4294901760
    %65 = vmatpush.msra.mxu0 %v64
    %v66 = vand.u32 %v44, 4294901760
    %67 = vmatpush.msra.mxu0 %v66
    %v68 = vand.u32 %v43, 4294901760
    %69 = vmatpush.msra.mxu0 %v68
    %v70 = vand.u32 %v42, 4294901760
    %71 = vmatpush.msra.mxu0 %v70
    %v72 = vand.u32 %v41, 4294901760
    %73 = vmatpush.msra.mxu0 %v72
    %v74 = vand.u32 %v40, 4294901760
    %75 = vmatpush.msra.mxu0 %v74
    %v76 = vand.u32 %v39, 4294901760
    %77 = vmatpush.msra.mxu0 %v76
    %v78 = vand.u32 %v38, 4294901760
    %79 = vmatpush.msra.mxu0 %v78
    %v80 = vand.u32 %v37, 4294901760
    %81 = vmatpush.msra.mxu0 %v80
    %v82 = vand.u32 %v36, 4294901760
    %83 = vmatpush.msra.mxu0 %v82
    %v84 = vand.u32 %v35, 4294901760
    %v85 = vsub.f32 %v35, %v84
    %v86 = vand.u32 %v85, 4294901760
    %v87 = vsub.f32 %v85, %v86
    %v88 = vand.u32 %v87, 4294901760
    %89 = vmatmul.f32.gmra.mxu0 %v88
    %v90 = vpop.f32.mrf.mxu0
    %v91 = vadd.f32 0.0, %v90
    %92 = vdwg.mxu0
    %v93 = vand.u32 %v51, 4294901760
    %v94 = vsub.f32 %v51, %v93
    %v95 = vand.u32 %v94, 4294901760
    %v96 = vsub.f32 %v94, %v95
    %v97 = vand.u32 %v96, 4294901760
    %98 = vmatpush.msra.mxu0 %v97
    %v99 = vand.u32 %v50, 4294901760
    %v100 = vsub.f32 %v50, %v99
    %v101 = vand.u32 %v100, 4294901760
    %v102 = vsub.f32 %v100, %v101
    %v103 = vand.u32 %v102, 4294901760
    %104 = vmatpush.msra.mxu0 %v103
    %v105 = vand.u32 %v49, 4294901760
    %v106 = vsub.f32 %v49, %v105
    %v107 = vand.u32 %v106, 4294901760
    %v108 = vsub.f32 %v106, %v107
    %v109 = vand.u32 %v108, 4294901760
    %110 = vmatpush.msra.mxu0 %v109
    %v111 = vand.u32 %v48, 4294901760
    %v112 = vsub.f32 %v48, %v111
    %v113 = vand.u32 %v112, 4294901760
    %v114 = vsub.f32 %v112, %v113
    %v115 = vand.u32 %v114, 4294901760
    %116 = vmatpush.msra.mxu0 %v115
    %v117 = vand.u32 %v47, 4294901760
    %v118 = vsub.f32 %v47, %v117
    %v119 = vand.u32 %v118, 4294901760
    %v120 = vsub.f32 %v118, %v119
    %v121 = vand.u32 %v120, 4294901760
    %122 = vmatpush.msra.mxu0 %v121
    %v123 = vand.u32 %v46, 4294901760
    %v124 = vsub.f32 %v46, %v123
    %v125 = vand.u32 %v124, 4294901760
    %v126 = vsub.f32 %v124, %v125
    %v127 = vand.u32 %v126, 4294901760
    %128 = vmatpush.msra.mxu0 %v127
    %v129 = vand.u32 %v45, 4294901760
    %v130 = vsub.f32 %v45, %v129
    %v131 = vand.u32 %v130, 4294901760
    %v132 = vsub.f32 %v130, %v131
    %v133 = vand.u32 %v132, 4294901760
    %134 = vmatpush.msra.mxu0 %v133
    %v135 = vand.u32 %v44, 4294901760
    %v136 = vsub.f32 %v44, %v135
    %v137 = vand.u32 %v136, 4294901760
    %v138 = vsub.f32 %v136, %v137
    %v139 = vand.u32 %v138, 4294901760
    %140 = vmatpush.msra.mxu0 %v139
    %v141 = vand.u32 %v43, 4294901760
    %v142 = vsub.f32 %v43, %v141
    %v143 = vand.u32 %v142, 4294901760
    %v144 = vsub.f32 %v142, %v143
    %v145 = vand.u32 %v144, 4294901760
    %146 = vmatpush.msra.mxu0 %v145
    %v147 = vand.u32 %v42, 4294901760
    %v148 = vsub.f32 %v42, %v147
    %v149 = vand.u32 %v148, 4294901760
    %v150 = vsub.f32 %v148, %v149
    %v151 = vand.u32 %v150, 4294901760
    %152 = vmatpush.msra.mxu0 %v151
    %v153 = vand.u32 %v41, 4294901760
    %v154 = vsub.f32 %v41, %v153
    %v155 = vand.u32 %v154, 4294901760
    %v156 = vsub.f32 %v154, %v155
    %v157 = vand.u32 %v156, 4294901760
    %158 = vmatpush.msra.mxu0 %v157
    %v159 = vand.u32 %v40, 4294901760
    %v160 = vsub.f32 %v40, %v159
    %v161 = vand.u32 %v160, 4294901760
    %v162 = vsub.f32 %v160, %v161
    %v163 = vand.u32 %v162, 4294901760
    %164 = vmatpush.msra.mxu0 %v163
    %v165 = vand.u32 %v39, 4294901760
    %v166 = vsub.f32 %v39, %v165
    %v167 = vand.u32 %v166, 4294901760
    %v168 = vsub.f32 %v166, %v167
    %v169 = vand.u32 %v168, 4294901760
    %170 = vmatpush.msra.mxu0 %v169
    %v171 = vand.u32 %v38, 4294901760
    %v172 = vsub.f32 %v38, %v171
    %v173 = vand.u32 %v172, 4294901760
    %v174 = vsub.f32 %v172, %v173
    %v175 = vand.u32 %v174, 4294901760
    %176 = vmatpush.msra.mxu0 %v175
    %v177 = vand.u32 %v37, 4294901760
    %v178 = vsub.f32 %v37, %v177
    %v179 = vand.u32 %v178, 4294901760
    %v180 = vsub.f32 %v178, %v179
    %v181 = vand.u32 %v180, 4294901760
    %182 = vmatpush.msra.mxu0 %v181
    %v183 = vand.u32 %v36, 4294901760
    %v184 = vsub.f32 %v36, %v183
    %v185 = vand.u32 %v184, 4294901760
    %v186 = vsub.f32 %v184, %v185
    %v187 = vand.u32 %v186, 4294901760
    %188 = vmatpush.msra.mxu0 %v187
    %v189 = vand.u32 %v35, 4294901760
    %190 = vmatmul.f32.gmra.mxu0 %v189
    %v191 = vpop.f32.mrf.mxu0
    %v192 = vadd.f32 %v91, %v191
    %193 = vdwg.mxu0
    %v194 = vand.u32 %v51, 4294901760
    %v195 = vsub.f32 %v51, %v194
    %196 = vmatpush.msra.mxu0 %v195
    %v197 = vand.u32 %v50, 4294901760
    %v198 = vsub.f32 %v50, %v197
    %199 = vmatpush.msra.mxu0 %v198
    %v200 = vand.u32 %v49, 4294901760
    %v201 = vsub.f32 %v49, %v200
    %202 = vmatpush.msra.mxu0 %v201
    %v203 = vand.u32 %v48, 4294901760
    %v204 = vsub.f32 %v48, %v203
    %205 = vmatpush.msra.mxu0 %v204
    %v206 = vand.u32 %v47, 4294901760
    %v207 = vsub.f32 %v47, %v206
    %208 = vmatpush.msra.mxu0 %v207
    %v209 = vand.u32 %v46, 4294901760
    %v210 = vsub.f32 %v46, %v209
    %211 = vmatpush.msra.mxu0 %v210
    %v212 = vand.u32 %v45, 4294901760
    %v213 = vsub.f32 %v45, %v212
    %214 = vmatpush.msra.mxu0 %v213
    %v215 = vand.u32 %v44, 4294901760
    %v216 = vsub.f32 %v44, %v215
    %217 = vmatpush.msra.mxu0 %v216
    %v218 = vand.u32 %v43, 4294901760
    %v219 = vsub.f32 %v43, %v218
    %220 = vmatpush.msra.mxu0 %v219
    %v221 = vand.u32 %v42, 4294901760
    %v222 = vsub.f32 %v42, %v221
    %223 = vmatpush.msra.mxu0 %v222
    %v224 = vand.u32 %v41, 4294901760
    %v225 = vsub.f32 %v41, %v224
    %226 = vmatpush.msra.mxu0 %v225
    %v227 = vand.u32 %v40, 4294901760
    %v228 = vsub.f32 %v40, %v227
    %229 = vmatpush.msra.mxu0 %v228
    %v230 = vand.u32 %v39, 4294901760
    %v231 = vsub.f32 %v39, %v230
    %232 = vmatpush.msra.mxu0 %v231
    %v233 = vand.u32 %v38, 4294901760
    %v234 = vsub.f32 %v38, %v233
    %235 = vmatpush.msra.mxu0 %v234
    %v236 = vand.u32 %v37, 4294901760
    %v237 = vsub.f32 %v37, %v236
    %238 = vmatpush.msra.mxu0 %v237
    %v239 = vand.u32 %v36, 4294901760
    %v240 = vsub.f32 %v36, %v239
    %241 = vmatpush.msra.mxu0 %v240
    %v242 = vand.u32 %v35, 4294901760
    %v243 = vsub.f32 %v35, %v242
    %244 = vmatmul.f32.gmra.mxu0 %v243
    %v245 = vpop.f32.mrf.mxu0
    %v246 = vadd.f32 %v192, %v245
    %247 = vdwg.mxu0
    %v248 = vand.u32 %v51, 4294901760
    %249 = vmatpush.msra.mxu0 %v248
    %v250 = vand.u32 %v50, 4294901760
    %251 = vmatpush.msra.mxu0 %v250
    %v252 = vand.u32 %v49, 4294901760
    %253 = vmatpush.msra.mxu0 %v252
    %v254 = vand.u32 %v48, 4294901760
    %255 = vmatpush.msra.mxu0 %v254
    %v256 = vand.u32 %v47, 4294901760
    %257 = vmatpush.msra.mxu0 %v256
    %v258 = vand.u32 %v46, 4294901760
    %259 = vmatpush.msra.mxu0 %v258
    %v260 = vand.u32 %v45, 4294901760
    %261 = vmatpush.msra.mxu0 %v260
    %v262 = vand.u32 %v44, 4294901760
    %263 = vmatpush.msra.mxu0 %v262
    %v264 = vand.u32 %v43, 4294901760
    %265 = vmatpush.msra.mxu0 %v264
    %v266 = vand.u32 %v42, 4294901760
    %267 = vmatpush.msra.mxu0 %v266
    %v268 = vand.u32 %v41, 4294901760
    %269 = vmatpush.msra.mxu0 %v268
    %v270 = vand.u32 %v40, 4294901760
    %271 = vmatpush.msra.mxu0 %v270
    %v272 = vand.u32 %v39, 4294901760
    %273 = vmatpush.msra.mxu0 %v272
    %v274 = vand.u32 %v38, 4294901760
    %275 = vmatpush.msra.mxu0 %v274
    %v276 = vand.u32 %v37, 4294901760
    %277 = vmatpush.msra.mxu0 %v276
    %v278 = vand.u32 %v36, 4294901760
    %279 = vmatpush.msra.mxu0 %v278
    %v280 = vand.u32 %v35, 4294901760
    %v281 = vsub.f32 %v35, %v280
    %v282 = vand.u32 %v281, 4294901760
    %283 = vmatmul.f32.gmra.mxu0 %v282
    %v284 = vpop.f32.mrf.mxu0
    %v285 = vadd.f32 %v246, %v284
    %286 = vdwg.mxu0
    %v287 = vand.u32 %v51, 4294901760
    %v288 = vsub.f32 %v51, %v287
    %v289 = vand.u32 %v288, 4294901760
    %290 = vmatpush.msra.mxu0 %v289
    %v291 = vand.u32 %v50, 4294901760
    %v292 = vsub.f32 %v50, %v291
    %v293 = vand.u32 %v292, 4294901760
    %294 = vmatpush.msra.mxu0 %v293
    %v295 = vand.u32 %v49, 4294901760
    %v296 = vsub.f32 %v49, %v295
    %v297 = vand.u32 %v296, 4294901760
    %298 = vmatpush.msra.mxu0 %v297
    %v299 = vand.u32 %v48, 4294901760
    %v300 = vsub.f32 %v48, %v299
    %v301 = vand.u32 %v300, 4294901760
    %302 = vmatpush.msra.mxu0 %v301
    %v303 = vand.u32 %v47, 4294901760
    %v304 = vsub.f32 %v47, %v303
    %v305 = vand.u32 %v304, 4294901760
    %306 = vmatpush.msra.mxu0 %v305
    %v307 = vand.u32 %v46, 4294901760
    %v308 = vsub.f32 %v46, %v307
    %v309 = vand.u32 %v308, 4294901760
    %310 = vmatpush.msra.mxu0 %v309
    %v311 = vand.u32 %v45, 4294901760
    %v312 = vsub.f32 %v45, %v311
    %v313 = vand.u32 %v312, 4294901760
    %314 = vmatpush.msra.mxu0 %v313
    %v315 = vand.u32 %v44, 4294901760
    %v316 = vsub.f32 %v44, %v315
    %v317 = vand.u32 %v316, 4294901760
    %318 = vmatpush.msra.mxu0 %v317
    %v319 = vand.u32 %v43, 4294901760
    %v320 = vsub.f32 %v43, %v319
    %v321 = vand.u32 %v320, 4294901760
    %322 = vmatpush.msra.mxu0 %v321
    %v323 = vand.u32 %v42, 4294901760
    %v324 = vsub.f32 %v42, %v323
    %v325 = vand.u32 %v324, 4294901760
    %326 = vmatpush.msra.mxu0 %v325
    %v327 = vand.u32 %v41, 4294901760
    %v328 = vsub.f32 %v41, %v327
    %v329 = vand.u32 %v328, 4294901760
    %330 = vmatpush.msra.mxu0 %v329
    %v331 = vand.u32 %v40, 4294901760
    %v332 = vsub.f32 %v40, %v331
    %v333 = vand.u32 %v332, 4294901760
    %334 = vmatpush.msra.mxu0 %v333
    %v335 = vand.u32 %v39, 4294901760
    %v336 = vsub.f32 %v39, %v335
    %v337 = vand.u32 %v336, 4294901760
    %338 = vmatpush.msra.mxu0 %v337
    %v339 = vand.u32 %v38, 4294901760
    %v340 = vsub.f32 %v38, %v339
    %v341 = vand.u32 %v340, 4294901760
    %342 = vmatpush.msra.mxu0 %v341
    %v343 = vand.u32 %v37, 4294901760
    %v344 = vsub.f32 %v37, %v343
    %v345 = vand.u32 %v344, 4294901760
    %346 = vmatpush.msra.mxu0 %v345
    %v347 = vand.u32 %v36, 4294901760
    %v348 = vsub.f32 %v36, %v347
    %v349 = vand.u32 %v348, 4294901760
    %350 = vmatpush.msra.mxu0 %v349
    %v351 = vand.u32 %v35, 4294901760
    %352 = vmatmul.f32.gmra.mxu0 %v351
    %v353 = vpop.f32.mrf.mxu0
    %v354 = vadd.f32 %v285, %v353
    %355 = vdwg.mxu0
    %v356 = vand.u32 %v51, 4294901760
    %357 = vmatpush.msra.mxu0 %v356
    %v358 = vand.u32 %v50, 4294901760
    %359 = vmatpush.msra.mxu0 %v358
    %v360 = vand.u32 %v49, 4294901760
    %361 = vmatpush.msra.mxu0 %v360
    %v362 = vand.u32 %v48, 4294901760
    %363 = vmatpush.msra.mxu0 %v362
    %v364 = vand.u32 %v47, 4294901760
    %365 = vmatpush.msra.mxu0 %v364
    %v366 = vand.u32 %v46, 4294901760
    %367 = vmatpush.msra.mxu0 %v366
    %v368 = vand.u32 %v45, 4294901760
    %369 = vmatpush.msra.mxu0 %v368
    %v370 = vand.u32 %v44, 4294901760
    %371 = vmatpush.msra.mxu0 %v370
    %v372 = vand.u32 %v43, 4294901760
    %373 = vmatpush.msra.mxu0 %v372
    %v374 = vand.u32 %v42, 4294901760
    %375 = vmatpush.msra.mxu0 %v374
    %v376 = vand.u32 %v41, 4294901760
    %377 = vmatpush.msra.mxu0 %v376
    %v378 = vand.u32 %v40, 4294901760
    %379 = vmatpush.msra.mxu0 %v378
    %v380 = vand.u32 %v39, 4294901760
    %381 = vmatpush.msra.mxu0 %v380
    %v382 = vand.u32 %v38, 4294901760
    %383 = vmatpush.msra.mxu0 %v382
    %v384 = vand.u32 %v37, 4294901760
    %385 = vmatpush.msra.mxu0 %v384
    %v386 = vand.u32 %v36, 4294901760
    %387 = vmatpush.msra.mxu0 %v386
    %v388 = vand.u32 %v35, 4294901760
    %389 = vmatmul.f32.gmra.mxu0 %v388
    %v390 = vpop.f32.mrf.mxu0
    %v391 = vadd.f32 %v354, %v390
    %392 = vdwg.mxu0
    %vm393 = vcmp.lt.s32.totalorder %v32, 32
    %v394 = vsel %vm393, 1, 0
    %v395 = vcvt.s32.f32 %v394
    %vm396 = vcmp.eq.s32.totalorder %v32, 32
    %v397 = vsel %vm396, 1, 0
    %v398 = vcvt.s32.f32 %v397
    %v399 = vmul.f32 %v391, %v391
    %v400 = vmul.f32 %v399, %v395
    %v401 = vmul.f32 %v391, %v398
    %v402 = vsub.f32 %v400, %v401
    %v403 = vmul.f32 %v402, 0.5
    %404 = vadd.xlane.f32.xlu0 %v403
    %v405 = vpop.xlane.xlu0 %404
    %v406 = vld [vmem:[%s2] sm:$0xff]
    %v407 = vadd.f32 %v406, %v405
    %vm408 = vcmask 7168
    %409 = vst.msk [vmem:[%s3] sm:$0xff] %vm408, %v407
    // Predicated region
    $region18: #{tpu_custom_call.1} parent=1 // pred_check
      _
    $region19: #{tpu_custom_call.1} parent=1 // pred_check_branch
      %411 = sbr.rel (0) target = $region21
    $region20: #{tpu_custom_call.1} parent=1 // pred_region
      _
    $region21: #{tpu_custom_call.1} parent=1 // pred_fallthru
      _
    // Predicated region
    $region22: #{tpu_custom_call.1} parent=1 // pred_check
      _
    $region23: #{tpu_custom_call.1} parent=1 // pred_check_branch
      %413 = sbr.rel (0) target = $region25
    $region24: #{tpu_custom_call.1} parent=1 // pred_region
      _
    $region25: #{tpu_custom_call.1} parent=1 // pred_fallthru
      _
    %414 = vsyncpa [#allocation3], 1

</llo_original>
